<compile_context>
chip_gen: v7x
topology: tpu7x:2x2x1
jax: 0.10.0
libtpu: 0.0.40
codegen_flags: <defaults>
</compile_context>

<pallas_src>
import jax
import jax.numpy as jnp
from jax import lax
from jax.experimental import pallas as pl
from jax.experimental.pallas import tpu as pltpu


def _attn_rollout_kernel(cam_ref, grad_ref, r_ref, region_ref):
    """One grid step == one (image, layer-chunk) pair of the rollout.

    cam_ref, grad_ref : (Lc, H, N, N) VMEM tiles for the current (image, layer-chunk)
    r_ref             : (N, N)        resident rollout accumulator (same block across the layer axis)
    region_ref        : (1, N)        normalized CLS row (written on the last step only;
                                      column 0 / CLS is dropped by the host wrapper)
    """
    step = pl.program_id(1)
    last_step = pl.num_programs(1) - 1
    layer_chunk, n_heads, n_tok, _ = cam_ref.shape
    inv_h = 1.0 / float(n_heads)

    def head_mean(li):
        # Per-head accumulation: keeps live temporaries at a single (N, N) slab,
        # multiply + relu stay in the input dtype (bf16 VALU on v6e/v7x).
        def body(h, acc):
            prod = cam_ref[li, h] * grad_ref[li, h]
            return acc + jnp.maximum(prod, 0.0).astype(jnp.float32)

        acc = lax.fori_loop(0, n_heads, body,
                            jnp.zeros((n_tok, n_tok), jnp.float32),
                            unroll=True)
        return acc * inv_h

    for li in range(layer_chunk):
        cam_bar = head_mean(li)                                   # (N, N) f32

        if li == 0:
            @pl.when(step == 0)
            def _():
                # R = I on the very first layer; R + cam_bar @ I == I + cam_bar,
                # so the first N^3 matmul is skipped entirely.
                row_id = lax.broadcasted_iota(jnp.int32, (n_tok, n_tok), 0)
                col_id = lax.broadcasted_iota(jnp.int32, (n_tok, n_tok), 1)
                eye = (row_id == col_id).astype(jnp.float32)
                r_ref[...] = eye + cam_bar

            @pl.when(step > 0)
            def _():
                r_cur = r_ref[...]
                r_ref[...] = r_cur + jnp.dot(
                    cam_bar, r_cur, preferred_element_type=jnp.float32)
        else:
            r_cur = r_ref[...]
            r_ref[...] = r_cur + jnp.dot(
                cam_bar, r_cur, preferred_element_type=jnp.float32)

    # Only the final step's normalized CLS->patch row is the "attention region".
    @pl.when(step == last_step)
    def _():
        row = r_ref[0:1, :]                                # (1, N) lane-dense, no offset slice
        col_id = lax.broadcasted_iota(jnp.int32, (1, n_tok), 1)
        is_patch = col_id >= 1                             # exclude CLS column from min/max
        lo = jnp.min(jnp.where(is_patch, row, jnp.inf))
        hi = jnp.max(jnp.where(is_patch, row, -jnp.inf))
        region_ref[...] = (row - lo) / (hi - lo + 1e-12)
    # TODO(synk): the original pipeline bilinearly upsamples the 14x14 patch map
    # to 224x224 (and then normalizes) before np.save; that resize + file I/O
    # stays in host code.


def attention_rollout(attn_cam: jax.Array, attn_grad: jax.Array,
                      *, max_layer_chunk: int = 4,
                      input_vmem_budget_bytes: int = 24 << 20):
    """Run the batched transformer-attribution rollout.

    attn_cam, attn_grad : (B, L, H, N, N) arrays (bf16 recommended, any float ok)
                          -- per-layer attention CAMs and their gradients.
    Returns:
      R      : (B, N, N)   f32 rollout matrices
      region : (B, N - 1)  f32 normalized CLS->patch attribution per image
    """
    B, L, H, N, _ = attn_cam.shape
    itemsize = jnp.dtype(attn_cam.dtype).itemsize

    # Pick the largest layer chunk that (a) divides L and (b) keeps the
    # double-buffered input footprint under a conservative budget that fits
    # v7x's 64 MiB physical VMEM with plenty of headroom.
    per_layer_bytes = 2 * 2 * H * N * N * itemsize       # 2 inputs x 2 pipeline buffers
    layer_chunk = 1
    for c in range(1, min(L, max_layer_chunk) + 1):
        if L % c == 0 and c * per_layer_bytes <= input_vmem_budget_bytes:
            layer_chunk = c

    # Explicit VMEM budget (inputs + resident outputs + a few (N,N) f32 slabs).
    needed = (layer_chunk * per_layer_bytes
              + 2 * (N * N + N) * 4
              + 8 * N * N * 4)
    vmem_limit = int(min(64 << 20, max(2 * needed, 16 << 20)))

    layer_spec = pl.BlockSpec(
        (pl.Squeezed(), layer_chunk, H, N, N),
        lambda b, l: (b, l, 0, 0, 0))

    r_out, region_full = pl.pallas_call(
        _attn_rollout_kernel,
        out_shape=(
            jax.ShapeDtypeStruct((B, N, N), jnp.float32),
            jax.ShapeDtypeStruct((B, 1, N), jnp.float32),
        ),
        grid_spec=pltpu.PrefetchScalarGridSpec(
            num_scalar_prefetch=0,
            grid=(B, L // layer_chunk),                    # batch outer (parallel), layer chunks inner (carried)
            in_specs=[layer_spec, layer_spec],
            out_specs=(
                pl.BlockSpec((pl.Squeezed(), N, N), lambda b, l: (b, 0, 0)),   # resident accumulator per image
                pl.BlockSpec((pl.Squeezed(), 1, N), lambda b, l: (b, 0, 0)),
            ),
        ),
        compiler_params=pltpu.CompilerParams(
            dimension_semantics=("parallel", "arbitrary"),
            vmem_limit_bytes=vmem_limit),
    )(attn_cam, attn_grad)

    region = region_full[:, 0, 1:]   # drop CLS column on the host (trivial XLA slice)
    return r_out, region


def _reference(attn_cam, attn_grad):
    """Pure-JAX reference mirroring the kernel math (for a correctness check)."""
    B, L, H, N, _ = attn_cam.shape
    # Product + relu in the input dtype (as the kernel does), f32 head mean.
    prod = jnp.maximum(attn_grad * attn_cam, 0.0).astype(jnp.float32)
    cam_bar = prod.mean(axis=2)                            # (B, L, N, N)
    Rs, regions = [], []
    for b in range(B):
        R = jnp.eye(N, dtype=jnp.float32)
        for l in range(L):
            R = R + cam_bar[b, l] @ R
        row = R[0, 1:]
        regions.append((row - row.min()) / (row.max() - row.min() + 1e-12))
        Rs.append(R)
    return jnp.stack(Rs), jnp.stack(regions)


if __name__ == "__main__":
    # Small synthetic ViT-like setup: 2 images, 4 blocks, 4 heads, 4x4 patch grid + CLS.
    B, L, H, GRID = 2, 4, 4, 4
    N = GRID * GRID + 1  # 17 tokens

    key = jax.random.PRNGKey(0)
    k_cam, k_grad = jax.random.split(key)

    # Deterministic stand-ins for what the LRP hooks would capture:
    #   attention CAMs ~ softmax over key tokens, gradients ~ N(0, 1).
    # Stored as bf16, as a real pipeline would, to halve the HBM streaming cost.
    logits = jax.random.normal(k_cam, (B, L, H, N, N), dtype=jnp.float32)
    attn_cam = jax.nn.softmax(logits, axis=-1).astype(jnp.bfloat16)
    attn_grad = jax.random.normal(
        k_grad, (B, L, H, N, N), dtype=jnp.float32).astype(jnp.bfloat16)

    # Reference computed from the same bf16 values (identical math up to f32
    # reassociation).
    R_ref, region_ref = _reference(attn_cam, attn_grad)

    # Run twice: once with layer chunking disabled (exercises the carried
    # accumulator across grid steps) and once with the default chunking.
    for max_lc in (1, 4):
        R, region = attention_rollout(attn_cam, attn_grad, max_layer_chunk=max_lc)
        R = jax.block_until_ready(R)
        region = jax.block_until_ready(region)
        assert jnp.allclose(R, R_ref, atol=2e-3, rtol=2e-3), \
            f"rollout matrix mismatch (max_layer_chunk={max_lc})"
        assert jnp.allclose(region, region_ref, atol=2e-3, rtol=2e-3), \
            f"region mismatch (max_layer_chunk={max_lc})"

    # The "attention region" per image, reshaped to the patch grid (what the
    # original module would np.save per input image, after bilinear upsample).
    _ = region.reshape(B, GRID, GRID)

    print("KERNEL_OK")
</pallas_src>

<mosaic_0001>
module attributes {stable_mosaic.version = 11 : i64} {
  func.func @_attn_rollout_kernel(%arg0: i32, %arg1: i32, %arg2: memref<1x1x4x17x17xbf16, #tpu.memory_space<vmem>>, %arg3: memref<1x1x4x17x17xbf16, #tpu.memory_space<vmem>>, %arg4: memref<1x17x17xf32, #tpu.memory_space<vmem>>, %arg5: memref<1x1x17xf32, #tpu.memory_space<vmem>>) attributes {dimension_semantics = [#tpu.dimension_semantics<parallel>, #tpu.dimension_semantics<arbitrary>], iteration_bounds = array<i64: 2, 4>, scalar_prefetch = 0 : i64, scratch_operands = 0 : i64, tpu.core_type = #tpu.core_type<tc>, window_params = [{transform_indices = @transform_0, window_bounds = array<i64: 1, 1, 4, 17, 17>}, {transform_indices = @transform_1, window_bounds = array<i64: 1, 1, 4, 17, 17>}, {transform_indices = @transform_2, window_bounds = array<i64: 1, 17, 17>}, {transform_indices = @transform_3, window_bounds = array<i64: 1, 1, 17>}]} {
    %cst = arith.constant 0.000000e+00 : f32
    %0 = vector.broadcast %cst : f32 to vector<17x17xf32>
    %c0_i32 = arith.constant 0 : i32
    %c0 = arith.constant 0 : index
    %c0_0 = arith.constant 0 : index
    %1 = arith.index_cast %c0_i32 : i32 to index
    %c0_1 = arith.constant 0 : index
    %c0_2 = arith.constant 0 : index
    %2 = vector.load %arg2[%c0, %c0_0, %1, %c0_1, %c0_2] : memref<1x1x4x17x17xbf16, #tpu.memory_space<vmem>>, vector<1x1x1x17x17xbf16>
    %3 = vector.shape_cast %2 : vector<1x1x1x17x17xbf16> to vector<17x17xbf16>
    %c0_3 = arith.constant 0 : index
    %c0_4 = arith.constant 0 : index
    %4 = arith.index_cast %c0_i32 : i32 to index
    %c0_5 = arith.constant 0 : index
    %c0_6 = arith.constant 0 : index
    %5 = vector.load %arg3[%c0_3, %c0_4, %4, %c0_5, %c0_6] : memref<1x1x4x17x17xbf16, #tpu.memory_space<vmem>>, vector<1x1x1x17x17xbf16>
    %6 = vector.shape_cast %5 : vector<1x1x1x17x17xbf16> to vector<17x17xbf16>
    %7 = arith.mulf %3, %6 : vector<17x17xbf16>
    %cst_7 = arith.constant 0.000000e+00 : bf16
    %8 = vector.broadcast %cst_7 : bf16 to vector<17x17xbf16>
    %9 = arith.maximumf %7, %8 : vector<17x17xbf16>
    %10 = arith.extf %9 : vector<17x17xbf16> to vector<17x17xf32>
    %11 = arith.addf %0, %10 : vector<17x17xf32>
    %c1_i32 = arith.constant 1 : i32
    %c0_8 = arith.constant 0 : index
    %c0_9 = arith.constant 0 : index
    %12 = arith.index_cast %c1_i32 : i32 to index
    %c0_10 = arith.constant 0 : index
    %c0_11 = arith.constant 0 : index
    %13 = vector.load %arg2[%c0_8, %c0_9, %12, %c0_10, %c0_11] : memref<1x1x4x17x17xbf16, #tpu.memory_space<vmem>>, vector<1x1x1x17x17xbf16>
    %14 = vector.shape_cast %13 : vector<1x1x1x17x17xbf16> to vector<17x17xbf16>
    %c0_12 = arith.constant 0 : index
    %c0_13 = arith.constant 0 : index
    %15 = arith.index_cast %c1_i32 : i32 to index
    %c0_14 = arith.constant 0 : index
    %c0_15 = arith.constant 0 : index
    %16 = vector.load %arg3[%c0_12, %c0_13, %15, %c0_14, %c0_15] : memref<1x1x4x17x17xbf16, #tpu.memory_space<vmem>>, vector<1x1x1x17x17xbf16>
    %17 = vector.shape_cast %16 : vector<1x1x1x17x17xbf16> to vector<17x17xbf16>
    %18 = arith.mulf %14, %17 : vector<17x17xbf16>
    %cst_16 = arith.constant 0.000000e+00 : bf16
    %19 = vector.broadcast %cst_16 : bf16 to vector<17x17xbf16>
    %20 = arith.maximumf %18, %19 : vector<17x17xbf16>
    %21 = arith.extf %20 : vector<17x17xbf16> to vector<17x17xf32>
    %22 = arith.addf %11, %21 : vector<17x17xf32>
    %c2_i32 = arith.constant 2 : i32
    %c0_17 = arith.constant 0 : index
    %c0_18 = arith.constant 0 : index
    %23 = arith.index_cast %c2_i32 : i32 to index
    %c0_19 = arith.constant 0 : index
    %c0_20 = arith.constant 0 : index
    %24 = vector.load %arg2[%c0_17, %c0_18, %23, %c0_19, %c0_20] : memref<1x1x4x17x17xbf16, #tpu.memory_space<vmem>>, vector<1x1x1x17x17xbf16>
    %25 = vector.shape_cast %24 : vector<1x1x1x17x17xbf16> to vector<17x17xbf16>
    %c0_21 = arith.constant 0 : index
    %c0_22 = arith.constant 0 : index
    %26 = arith.index_cast %c2_i32 : i32 to index
    %c0_23 = arith.constant 0 : index
    %c0_24 = arith.constant 0 : index
    %27 = vector.load %arg3[%c0_21, %c0_22, %26, %c0_23, %c0_24] : memref<1x1x4x17x17xbf16, #tpu.memory_space<vmem>>, vector<1x1x1x17x17xbf16>
    %28 = vector.shape_cast %27 : vector<1x1x1x17x17xbf16> to vector<17x17xbf16>
    %29 = arith.mulf %25, %28 : vector<17x17xbf16>
    %cst_25 = arith.constant 0.000000e+00 : bf16
    %30 = vector.broadcast %cst_25 : bf16 to vector<17x17xbf16>
    %31 = arith.maximumf %29, %30 : vector<17x17xbf16>
    %32 = arith.extf %31 : vector<17x17xbf16> to vector<17x17xf32>
    %33 = arith.addf %22, %32 : vector<17x17xf32>
    %c3_i32 = arith.constant 3 : i32
    %c0_26 = arith.constant 0 : index
    %c0_27 = arith.constant 0 : index
    %34 = arith.index_cast %c3_i32 : i32 to index
    %c0_28 = arith.constant 0 : index
    %c0_29 = arith.constant 0 : index
    %35 = vector.load %arg2[%c0_26, %c0_27, %34, %c0_28, %c0_29] : memref<1x1x4x17x17xbf16, #tpu.memory_space<vmem>>, vector<1x1x1x17x17xbf16>
    %36 = vector.shape_cast %35 : vector<1x1x1x17x17xbf16> to vector<17x17xbf16>
    %c0_30 = arith.constant 0 : index
    %c0_31 = arith.constant 0 : index
    %37 = arith.index_cast %c3_i32 : i32 to index
    %c0_32 = arith.constant 0 : index
    %c0_33 = arith.constant 0 : index
    %38 = vector.load %arg3[%c0_30, %c0_31, %37, %c0_32, %c0_33] : memref<1x1x4x17x17xbf16, #tpu.memory_space<vmem>>, vector<1x1x1x17x17xbf16>
    %39 = vector.shape_cast %38 : vector<1x1x1x17x17xbf16> to vector<17x17xbf16>
    %40 = arith.mulf %36, %39 : vector<17x17xbf16>
    %cst_34 = arith.constant 0.000000e+00 : bf16
    %41 = vector.broadcast %cst_34 : bf16 to vector<17x17xbf16>
    %42 = arith.maximumf %40, %41 : vector<17x17xbf16>
    %43 = arith.extf %42 : vector<17x17xbf16> to vector<17x17xf32>
    %44 = arith.addf %33, %43 : vector<17x17xf32>
    %c4_i32 = arith.constant 4 : i32
    %cst_35 = arith.constant 2.500000e-01 : f32
    %45 = vector.broadcast %cst_35 : f32 to vector<17x17xf32>
    %46 = arith.mulf %44, %45 : vector<17x17xf32>
    %c0_i32_36 = arith.constant 0 : i32
    %47 = arith.cmpi eq, %arg1, %c0_i32_36 : i32
    %48 = arith.extui %47 : i1 to i32
    %c0_i32_37 = arith.constant 0 : i32
    %49 = arith.cmpi ne, %48, %c0_i32_37 : i32
    scf.if %49 {
      %56 = tpu.iota {dimensions = array<i32: 0>} : vector<17x17xi32>
      %57 = tpu.iota {dimensions = array<i32: 1>} : vector<17x17xi32>
      %58 = arith.cmpi eq, %56, %57 : vector<17x17xi32>
      %59 = arith.extui %58 : vector<17x17xi1> to vector<17x17xi32>
      %60 = arith.sitofp %59 : vector<17x17xi32> to vector<17x17xf32>
      %61 = arith.addf %60, %46 : vector<17x17xf32>
      %c0_42 = arith.constant 0 : index
      %c0_43 = arith.constant 0 : index
      %c0_44 = arith.constant 0 : index
      %62 = vector.load %arg4[%c0_42, %c0_43, %c0_44] : memref<1x17x17xf32, #tpu.memory_space<vmem>>, vector<1x17x17xf32>
      %63 = vector.shape_cast %62 : vector<1x17x17xf32> to vector<17x17xf32>
      %64 = vector.shape_cast %61 : vector<17x17xf32> to vector<1x17x17xf32>
      tpu.vector_store %arg4[%c0_42, %c0_43, %c0_44], %64 {strides = array<i32>} : memref<1x17x17xf32, #tpu.memory_space<vmem>>, vector<1x17x17xf32>,
    } else {
    }
    %c0_i32_38 = arith.constant 0 : i32
    %50 = arith.cmpi sgt, %arg1, %c0_i32_38 : i32
    %51 = arith.extui %50 : i1 to i32
    %c0_i32_39 = arith.constant 0 : i32
    %52 = arith.cmpi ne, %51, %c0_i32_39 : i32
    scf.if %52 {
      %c0_42 = arith.constant 0 : index
      %c0_43 = arith.constant 0 : index
      %c0_44 = arith.constant 0 : index
      %56 = vector.load %arg4[%c0_42, %c0_43, %c0_44] : memref<1x17x17xf32, #tpu.memory_space<vmem>>, vector<1x17x17xf32>
      %57 = vector.shape_cast %56 : vector<1x17x17xf32> to vector<17x17xf32>
      %cst_45 = arith.constant dense<0.000000e+00> : vector<17x17xf32>
      %58 = tpu.matmul %46, %57, %cst_45 {dimension_numbers = #tpu.dot_dimension_numbers<[1], [0], [0], [1], [0, 0, 1, 1], [], []>} : vector<17x17xf32>, vector<17x17xf32>, vector<17x17xf32> -> vector<17x17xf32>
      %59 = arith.addf %57, %58 : vector<17x17xf32>
      %c0_46 = arith.constant 0 : index
      %c0_47 = arith.constant 0 : index
      %c0_48 = arith.constant 0 : index
      %60 = vector.load %arg4[%c0_46, %c0_47, %c0_48] : memref<1x17x17xf32, #tpu.memory_space<vmem>>, vector<1x17x17xf32>
      %61 = vector.shape_cast %60 : vector<1x17x17xf32> to vector<17x17xf32>
      %62 = vector.shape_cast %59 : vector<17x17xf32> to vector<1x17x17xf32>
      tpu.vector_store %arg4[%c0_46, %c0_47, %c0_48], %62 {strides = array<i32>} : memref<1x17x17xf32, #tpu.memory_space<vmem>>, vector<1x17x17xf32>,
    } else {
    }
    %c3_i32_40 = arith.constant 3 : i32
    %53 = arith.cmpi eq, %arg1, %c3_i32_40 : i32
    %54 = arith.extui %53 : i1 to i32
    %c0_i32_41 = arith.constant 0 : i32
    %55 = arith.cmpi ne, %54, %c0_i32_41 : i32
    scf.if %55 {
      %c0_42 = arith.constant 0 : index
      %c0_43 = arith.constant 0 : index
      %c0_44 = arith.constant 0 : index
      %56 = vector.load %arg4[%c0_42, %c0_43, %c0_44] : memref<1x17x17xf32, #tpu.memory_space<vmem>>, vector<1x1x17xf32>
      %57 = vector.shape_cast %56 : vector<1x1x17xf32> to vector<1x17xf32>
      %58 = tpu.iota {dimensions = array<i32: 1>} : vector<1x17xi32>
      %c1_i32_45 = arith.constant 1 : i32
      %59 = vector.broadcast %c1_i32_45 : i32 to vector<1x17xi32>
      %60 = arith.cmpi sge, %58, %59 : vector<1x17xi32>
      %cst_46 = arith.constant 0x7F800000 : f32
      %61 = vector.broadcast %cst_46 : f32 to vector<1x17xf32>
      %62 = arith.select %60, %57, %61 : vector<1x17xi1>, vector<1x17xf32>
      %63 = vector.shape_cast %62 : vector<1x17xf32> to vector<1x1x17xf32>
      %cst_47 = arith.constant dense<0x7F800000> : vector<1xf32>
      %64 = vector.multi_reduction <minimumf>, %63, %cst_47 [1, 2] : vector<1x1x17xf32> to vector<1xf32>
      %65 = vector.shape_cast %64 : vector<1xf32> to vector<1x1x1xf32>
      %66 = vector.extract %65[0, 0, 0] : f32 from vector<1x1x1xf32>
      %cst_48 = arith.constant 0xFF800000 : f32
      %67 = vector.broadcast %cst_48 : f32 to vector<1x17xf32>
      %68 = arith.select %60, %57, %67 : vector<1x17xi1>, vector<1x17xf32>
      %69 = vector.shape_cast %68 : vector<1x17xf32> to vector<1x1x17xf32>
      %cst_49 = arith.constant dense<0xFF800000> : vector<1xf32>
      %70 = vector.multi_reduction <maximumf>, %69, %cst_49 [1, 2] : vector<1x1x17xf32> to vector<1xf32>
      %71 = vector.shape_cast %70 : vector<1xf32> to vector<1x1x1xf32>
      %72 = vector.extract %71[0, 0, 0] : f32 from vector<1x1x1xf32>
      %73 = vector.broadcast %66 : f32 to vector<1x17xf32>
      %74 = arith.subf %57, %73 : vector<1x17xf32>
      %75 = arith.subf %72, %66 : f32
      %cst_50 = arith.constant 9.99999996E-13 : f32
      %76 = arith.addf %75, %cst_50 : f32
      %77 = vector.broadcast %76 : f32 to vector<1x17xf32>
      %78 = arith.divf %74, %77 : vector<1x17xf32>
      %c0_51 = arith.constant 0 : index
      %c0_52 = arith.constant 0 : index
      %c0_53 = arith.constant 0 : index
      %79 = vector.load %arg5[%c0_51, %c0_52, %c0_53] : memref<1x1x17xf32, #tpu.memory_space<vmem>>, vector<1x1x17xf32>
      %80 = vector.shape_cast %79 : vector<1x1x17xf32> to vector<1x17xf32>
      %81 = vector.shape_cast %78 : vector<1x17xf32> to vector<1x1x17xf32>
      tpu.vector_store %arg5[%c0_51, %c0_52, %c0_53], %81 {strides = array<i32>} : memref<1x1x17xf32, #tpu.memory_space<vmem>>, vector<1x1x17xf32>,
    } else {
    }
    return
  }
  func.func @transform_0(%arg0: i32, %arg1: i32) -> (i32, i32, i32, i32, i32) {
    %c0_i32 = arith.constant 0 : i32
    %c0_i32_0 = arith.constant 0 : i32
    %c0_i32_1 = arith.constant 0 : i32
    %c0_i32_2 = arith.constant 0 : i32
    return %arg0, %arg1, %c0_i32, %c0_i32_0, %c0_i32_1 : i32, i32, i32, i32, i32
  }
  func.func @transform_1(%arg0: i32, %arg1: i32) -> (i32, i32, i32, i32, i32) {
    %c0_i32 = arith.constant 0 : i32
    %c0_i32_0 = arith.constant 0 : i32
    %c0_i32_1 = arith.constant 0 : i32
    %c0_i32_2 = arith.constant 0 : i32
    return %arg0, %arg1, %c0_i32, %c0_i32_0, %c0_i32_1 : i32, i32, i32, i32, i32
  }
  func.func @transform_2(%arg0: i32, %arg1: i32) -> (i32, i32, i32) {
    %c0_i32 = arith.constant 0 : i32
    %c0_i32_0 = arith.constant 0 : i32
    %c0_i32_1 = arith.constant 0 : i32
    return %arg0, %c0_i32, %c0_i32_0 : i32, i32, i32
  }
  func.func @transform_3(%arg0: i32, %arg1: i32) -> (i32, i32, i32) {
    %c0_i32 = arith.constant 0 : i32
    %c0_i32_0 = arith.constant 0 : i32
    %c0_i32_1 = arith.constant 0 : i32
    return %arg0, %c0_i32, %c0_i32_0 : i32, i32, i32
  }
}

</mosaic_0001>

<llo_original>
// kernel: tpu_custom_call.1
$region0: #{tpu_custom_call.1}
  #allocation0 [shape = 'u32[]', space=smem, size = 0x4, offset = 0x4, fixed_abs, tag = 'smem constant byte address 0x4 - core index']
  #allocation1 [shape = 'u32[144,128]{1,0:T(1,128)}', space=vmem, size = 0x12000, scoped, tag = 'internal scratch']
  %s0 = inlined_call_operand.vmem [shape: bf16[2,4,4,17,17], index: 0, kind: input, shape index: {}]
  %s1 = inlined_call_operand.vmem [shape: bf16[2,4,4,17,17], index: 1, kind: input, shape index: {}]
  %s2 = inlined_call_operand.vmem [shape: f32[2,17,17], index: 2, kind: output, shape index: {0}]
  %s3 = inlined_call_operand.hbm [shape: f32[2,1,17], index: 3, kind: output, shape index: {1}]
  %4 = xla_tuple %s2, %s3
  %s5 = sld [smem:[#allocation0]]
  $region61: #{tpu_custom_call.1} parent=0
    _
  %s7 = ssub.s32 1, %s5
  %s8 = scalar_select 0, %s7, %s5
  $region1: #{tpu_custom_call.1} parent=0
    #allocation2 [shape = 'u8[1024]{0}', space=vmem, size = 0x400, scoped, tag = 'output window, operand 1']
    #allocation3 [shape = 's32[2]{0}', space=sflag, size = 0x8, scoped, tag = 'scoped memory for tpu_custom_call.1']
    %9 = vsyncpa [#allocation3], 0
    %s10 = scalar_lea.sflag [#allocation3], 1
    %11 = vsyncpa %s10, 0
    loop: start=0, step=1, limit=10
    $region2: #{tpu_custom_call.1} parent=1 // loop_pre_header
      _
    $region3: #{tpu_custom_call.1} parent=1 // loop_header
      %s13 = sphi 0, %s17
      %p14 = scmp.ge.s32.totalorder %s13, 10
      %s20 = sphi 0, %s32
      %s21 = sphi 0, %s28
      %s22 = sphi 0, %s20
      %s23 = sphi 0, %s21
      %s24 = sphi 0, %s22
      %s25 = sphi 0, %s23
      %s37 = sphi 0, %s39
      %s40 = sphi 0, %s37
      %s41 = sphi 0, %s40
      %s57 = sphi 0, %s41
      %s65 = sphi 0, %s67
      %s68 = sphi 0, %s65
      %s69 = sphi 0, %s68
      %s85 = sphi 0, %s69
      %s91 = sphi 0, %s93
      %s94 = sphi 0, %s91
      %s95 = sphi 0, %s94
      %s111 = sphi 0, %s95
      %s117 = sphi 0, %s119
      %s120 = sphi 0, %s117
      %s121 = sphi 0, %s120
      %s137 = sphi 0, %s121
    $region4: #{tpu_custom_call.1} parent=1 // loop_header_branch
      %16 = sbr.rel (%p14) target = $region8
    $region5: #{tpu_custom_call.1} parent=1 // loop_body
      %s18 = ssub.s32 %s13, 1
      %s19 = ssub.s32 %s13, 2
      %s26 = sadd.s32 1, %s21
      %p27 = scmp.ge.s32.totalorder %s26, 4
      %s28 = scalar_select %p27, 0, %s26
      %s29 = sadd.s32 1, %s20
      %s30 = scalar_select %p27, %s29, %s20
      %p31 = scmp.ge.s32.totalorder %s30, 2
      %s32 = scalar_select %p31, 0, %s30
      %s33 = ssub.s32 %s20, %s32
      %s34 = ssub.s32 %s21, %s28
      %s35 = sor.u32 %s33, %s34
      %p36 = scmp.eq.s32.totalorder %s35, 0
      %s38 = sadd.s32 %s37, 1
      %s39 = scalar_select %p36, %s37, %s38
      %p42 = pneg %p36
      %p43 = scmp.eq.s32.totalorder %s13, 7
      %p44 = por %p42, %p43
      %p45 = scmp.ne.s32.totalorder %s37, %s40
      %p46 = scmp.eq.s32.totalorder %s13, 0
      %p47 = por %p45, %p46
      %p48 = scmp.ne.s32.totalorder %s37, %s40
      %p49 = scmp.eq.s32.totalorder %s18, 7
      %p50 = por %p48, %p49
      %p51 = scmp.ne.s32.totalorder %s40, %s41
      %p52 = scmp.eq.s32.totalorder %s18, 0
      %p53 = por %p51, %p52
      %p54 = scmp.ne.s32.totalorder %s40, %s41
      %p55 = scmp.eq.s32.totalorder %s19, 7
      %p56 = por %p54, %p55
      %p58 = scmp.ne.s32.totalorder %s41, %s57
      %p59 = scmp.eq.s32.totalorder %s19, 0
      %p60 = por %p58, %p59
      %s61 = ssub.s32 %s20, %s32
      %s62 = ssub.s32 %s21, %s28
      %s63 = sor.u32 %s61, %s62
      %p64 = scmp.eq.s32.totalorder %s63, 0
      %s66 = sadd.s32 %s65, 1
      %s67 = scalar_select %p64, %s65, %s66
      %p70 = pneg %p64
      %p71 = scmp.eq.s32.totalorder %s13, 7
      %p72 = por %p70, %p71
      %p73 = scmp.ne.s32.totalorder %s65, %s68
      %p74 = scmp.eq.s32.totalorder %s13, 0
      %p75 = por %p73, %p74
      %p76 = scmp.ne.s32.totalorder %s65, %s68
      %p77 = scmp.eq.s32.totalorder %s18, 7
      %p78 = por %p76, %p77
      %p79 = scmp.ne.s32.totalorder %s68, %s69
      %p80 = scmp.eq.s32.totalorder %s18, 0
      %p81 = por %p79, %p80
      %p82 = scmp.ne.s32.totalorder %s68, %s69
      %p83 = scmp.eq.s32.totalorder %s19, 7
      %p84 = por %p82, %p83
      %p86 = scmp.ne.s32.totalorder %s69, %s85
      %p87 = scmp.eq.s32.totalorder %s19, 0
      %p88 = por %p86, %p87
      %s89 = ssub.s32 %s20, %s32
      %p90 = scmp.eq.s32.totalorder %s89, 0
      %s92 = sadd.s32 %s91, 1
      %s93 = scalar_select %p90, %s91, %s92
      %p96 = pneg %p90
      %p97 = scmp.eq.s32.totalorder %s13, 7
      %p98 = por %p96, %p97
      %p99 = scmp.ne.s32.totalorder %s91, %s94
      %p100 = scmp.eq.s32.totalorder %s13, 0
      %p101 = por %p99, %p100
      %p102 = scmp.ne.s32.totalorder %s91, %s94
      %p103 = scmp.eq.s32.totalorder %s18, 7
      %p104 = por %p102, %p103
      %p105 = scmp.ne.s32.totalorder %s94, %s95
      %p106 = scmp.eq.s32.totalorder %s18, 0
      %p107 = por %p105, %p106
      %p108 = scmp.ne.s32.totalorder %s94, %s95
      %p109 = scmp.eq.s32.totalorder %s19, 7
      %p110 = por %p108, %p109
      %p112 = scmp.ne.s32.totalorder %s95, %s111
      %p113 = scmp.eq.s32.totalorder %s19, 0
      %p114 = por %p112, %p113
      %s115 = ssub.s32 %s20, %s32
      %p116 = scmp.eq.s32.totalorder %s115, 0
      %s118 = sadd.s32 %s117, 1
      %s119 = scalar_select %p116, %s117, %s118
      %p122 = pneg %p116
      %p123 = scmp.eq.s32.totalorder %s13, 7
      %p124 = por %p122, %p123
      %p125 = scmp.ne.s32.totalorder %s117, %s120
      %p126 = scmp.eq.s32.totalorder %s13, 0
      %p127 = por %p125, %p126
      %p128 = scmp.ne.s32.totalorder %s117, %s120
      %p129 = scmp.eq.s32.totalorder %s18, 7
      %p130 = por %p128, %p129
      %p131 = scmp.ne.s32.totalorder %s120, %s121
      %p132 = scmp.eq.s32.totalorder %s18, 0
      %p133 = por %p131, %p132
      %p134 = scmp.ne.s32.totalorder %s120, %s121
      %p135 = scmp.eq.s32.totalorder %s19, 7
      %p136 = por %p134, %p135
      %p138 = scmp.ne.s32.totalorder %s121, %s137
      %p139 = scmp.eq.s32.totalorder %s19, 0
      %p140 = por %p138, %p139
      %p141 = scmp.le.s32.totalorder 1, %s13
      %p142 = scmp.lt.s32.totalorder %s13, 9
      %p143 = pnand %p141, %p142
      %p144 = pneg %p143
      // Predicated region
      $region9: #{tpu_custom_call.1} parent=5 // pred_check
        _
      $region10: #{tpu_custom_call.1} parent=5 // pred_check_branch
        %146 = sbr.rel (%p143) target = $region12
      $region11: #{tpu_custom_call.1} parent=5 // pred_region
        %s147 = ssub.s32 %s13, 1
      $region12: #{tpu_custom_call.1} parent=5 // pred_fallthru
        _
      %p148 = scmp.lt.s32.totalorder %s13, 8
      // Predicated region
      $region13: #{tpu_custom_call.1} parent=5 // pred_check
        %p149 = pneg %p148
      $region14: #{tpu_custom_call.1} parent=5 // pred_check_branch
        %151 = sbr.rel (%p149) target = $region16
      $region15: #{tpu_custom_call.1} parent=5 // pred_region
        // Predicated region
        $region17: #{tpu_custom_call.1} parent=15 // pred_check
          %p152 = pneg %p47
        $region18: #{tpu_custom_call.1} parent=15 // pred_check_branch
          %154 = sbr.rel (%p152) target = $region20
        $region19: #{tpu_custom_call.1} parent=15 // pred_region
          %p155 = scmp.lt.s32.totalorder %s20, 1
          %s156 = scalar_select %p155, %s20, 1
          %p157 = scmp.lt.s32.totalorder %s21, 3
          %s158 = scalar_select %p157, %s21, 3
          %s159 = smul.addr %s158, 12
          %s160 = smul.addr %s156, 48
          %s161 = sadd.s32 %s159, %s160
          %s162 = smul.addr %s161, 4
          %s163 = scalar_lea.vmem %s0, %s162
        $region20: #{tpu_custom_call.1} parent=15 // pred_fallthru
          _
        // Predicated region
        $region21: #{tpu_custom_call.1} parent=15 // pred_check
          %p164 = pneg %p75
        $region22: #{tpu_custom_call.1} parent=15 // pred_check_branch
          %166 = sbr.rel (%p164) target = $region24
        $region23: #{tpu_custom_call.1} parent=15 // pred_region
          %p167 = scmp.lt.s32.totalorder %s20, 1
          %s168 = scalar_select %p167, %s20, 1
          %p169 = scmp.lt.s32.totalorder %s21, 3
          %s170 = scalar_select %p169, %s21, 3
          %s171 = smul.addr %s170, 12
          %s172 = smul.addr %s168, 48
          %s173 = sadd.s32 %s171, %s172
          %s174 = smul.addr %s173, 4
          %s175 = scalar_lea.vmem %s1, %s174
        $region24: #{tpu_custom_call.1} parent=15 // pred_fallthru
          _
      $region16: #{tpu_custom_call.1} parent=5 // pred_fallthru
        _
      %p176 = scmp.le.s32.totalorder 1, %s13
      %p177 = scmp.lt.s32.totalorder %s13, 9
      %p178 = pnand %p176, %p177
      %p179 = pneg %p178
      // Predicated region
      $region25: #{tpu_custom_call.1} parent=5 // pred_check
        _
      $region26: #{tpu_custom_call.1} parent=5 // pred_check_branch
        %181 = sbr.rel (%p178) target = $region28
      $region27: #{tpu_custom_call.1} parent=5 // pred_region
        %s182 = ssub.s32 %s13, 1
        %p183 = scmp.lt.s32.totalorder %s22, 1
        %s184 = scalar_select %p183, %s22, 1
        %p185 = scmp.lt.s32.totalorder %s23, 3
        %s186 = scalar_select %p185, %s23, 3
        %s187 = smul.addr %s186, 12
        %s188 = smul.addr %s184, 48
        %s189 = sadd.s32 %s187, %s188
        %s190 = smul.addr %s189, 4
        %s191 = scalar_lea.vmem %s0, %s190
        %p192 = pneg %p53
        %p193 = pneg %p50
        %p194 = scmp.lt.s32.totalorder %s22, 1
        %s195 = scalar_select %p194, %s22, 1
        %p196 = scmp.lt.s32.totalorder %s23, 3
        %s197 = scalar_select %p196, %s23, 3
        %s198 = smul.addr %s197, 12
        %s199 = smul.addr %s195, 48
        %s200 = sadd.s32 %s198, %s199
        %s201 = smul.addr %s200, 4
        %s202 = scalar_lea.vmem %s1, %s201
        %p203 = pneg %p81
        %p204 = pneg %p78
        %p205 = pneg %p107
        %p206 = pneg %p104
        %p207 = scmp.lt.s32.totalorder %s22, 1
        %s208 = scalar_select %p207, %s22, 1
        %s209 = smul.addr %s208, 3
        %s210 = smul.addr %s209, 8
        %s211 = scalar_lea.vmem %s2, %s210
        %p212 = pneg %p133
        %p213 = pneg %p130
        %s214 = sand.u32 %s120, 1
        %s215 = scalar_lea.sflag [#allocation3], %s214
        %s216 = sand.u32 %s120, 1
        %s217 = scalar_lea.vmem [#allocation2], %s216
        %p218 = scmp.lt.s32.totalorder %s22, 1
        %s219 = scalar_select %p218, %s22, 1
        %p220 = scmp.lt.s32.totalorder %s23, 3
        %s221 = scalar_select %p220, %s23, 3
        %s222 = smul.addr %s221, 12
        %s223 = smul.addr %s219, 48
        %s224 = sadd.s32 %s222, %s223
        %s225 = smul.addr %s224, 4
        %s226 = scalar_lea.vmem %s0, %s225
        %p227 = scmp.lt.s32.totalorder %s22, 1
        %s228 = scalar_select %p227, %s22, 1
        %p229 = scmp.lt.s32.totalorder %s23, 3
        %s230 = scalar_select %p229, %s23, 3
        %s231 = smul.addr %s230, 12
        %s232 = smul.addr %s228, 48
        %s233 = sadd.s32 %s231, %s232
        %s234 = smul.addr %s233, 4
        %s235 = scalar_lea.vmem %s1, %s234
        %p236 = scmp.lt.s32.totalorder %s22, 1
        %s237 = scalar_select %p236, %s22, 1
        %s238 = smul.addr %s237, 3
        %s239 = smul.addr %s238, 8
        %s240 = scalar_lea.vmem %s2, %s239
        %v242 = vld [vmem:[%s226] sm:$0xf]
        %v243 = vld [vmem:[%s226 + $0x4] sm:$0xf]
        %v244 = vld [vmem:[%s226 + $0x8] sm:$0x1]
        %v245 = vld [vmem:[%s235] sm:$0xf]
        %v246 = vld [vmem:[%s235 + $0x4] sm:$0xf]
        %v247 = vld [vmem:[%s235 + $0x8] sm:$0x1]
        %v248 = vmul.bf16 %v242, %v245
        %v249 = vmul.bf16 %v243, %v246
        %v250 = vmul.bf16 %v244, %v247
        %v251 = vmax.bf16 %v248, 0
        %v252 = vmax.bf16 %v249, 0
        %v253 = vmax.bf16 %v250, 0
        %v254 = vunpack.c.l.bf16 %v251
        %v255 = vunpack.c.l.bf16 %v252
        %v256 = vunpack.c.l.bf16 %v253
        %v257 = vadd.f32 %v254, 0.0
        %v258 = vadd.f32 %v255, 0.0
        %v259 = vadd.f32 %v256, 0.0
        %s260 = scalar_lea.vmem %s226, 12
        %v261 = vld [vmem:[%s260] sm:$0xf]
        %v262 = vld [vmem:[%s260 + $0x4] sm:$0xf]
        %v263 = vld [vmem:[%s260 + $0x8] sm:$0x1]
        %s264 = scalar_lea.vmem %s235, 12
        %v265 = vld [vmem:[%s264] sm:$0xf]
        %v266 = vld [vmem:[%s264 + $0x4] sm:$0xf]
        %v267 = vld [vmem:[%s264 + $0x8] sm:$0x1]
        %v268 = vmul.bf16 %v261, %v265
        %v269 = vmul.bf16 %v262, %v266
        %v270 = vmul.bf16 %v263, %v267
        %v271 = vmax.bf16 %v268, 0
        %v272 = vmax.bf16 %v269, 0
        %v273 = vmax.bf16 %v270, 0
        %v274 = vunpack.c.l.bf16 %v271
        %v275 = vunpack.c.l.bf16 %v272
        %v276 = vunpack.c.l.bf16 %v273
        %v277 = vadd.f32 %v257, %v274
        %v278 = vadd.f32 %v258, %v275
        %v279 = vadd.f32 %v259, %v276
        %s280 = scalar_lea.vmem %s226, 24
        %v281 = vld [vmem:[%s280] sm:$0xf]
        %v282 = vld [vmem:[%s280 + $0x4] sm:$0xf]
        %v283 = vld [vmem:[%s280 + $0x8] sm:$0x1]
        %s284 = scalar_lea.vmem %s235, 24
        %v285 = vld [vmem:[%s284] sm:$0xf]
        %v286 = vld [vmem:[%s284 + $0x4] sm:$0xf]
        %v287 = vld [vmem:[%s284 + $0x8] sm:$0x1]
        %v288 = vmul.bf16 %v281, %v285
        %v289 = vmul.bf16 %v282, %v286
        %v290 = vmul.bf16 %v283, %v287
        %v291 = vmax.bf16 %v288, 0
        %v292 = vmax.bf16 %v289, 0
        %v293 = vmax.bf16 %v290, 0
        %v294 = vunpack.c.l.bf16 %v291
        %v295 = vunpack.c.l.bf16 %v292
        %v296 = vunpack.c.l.bf16 %v293
        %v297 = vadd.f32 %v277, %v294
        %v298 = vadd.f32 %v278, %v295
        %v299 = vadd.f32 %v279, %v296
        %s300 = scalar_lea.vmem %s226, 36
        %v301 = vld [vmem:[%s300] sm:$0xf]
        %v302 = vld [vmem:[%s300 + $0x4] sm:$0xf]
        %v303 = vld [vmem:[%s300 + $0x8] sm:$0x1]
        %s304 = scalar_lea.vmem %s235, 36
        %v305 = vld [vmem:[%s304] sm:$0xf]
        %v306 = vld [vmem:[%s304 + $0x4] sm:$0xf]
        %v307 = vld [vmem:[%s304 + $0x8] sm:$0x1]
        %v308 = vmul.bf16 %v301, %v305
        %v309 = vmul.bf16 %v302, %v306
        %v310 = vmul.bf16 %v303, %v307
        %v311 = vmax.bf16 %v308, 0
        %v312 = vmax.bf16 %v309, 0
        %v313 = vmax.bf16 %v310, 0
        %v314 = vunpack.c.l.bf16 %v311
        %v315 = vunpack.c.l.bf16 %v312
        %v316 = vunpack.c.l.bf16 %v313
        %v317 = vadd.f32 %v297, %v314
        %v318 = vadd.f32 %v298, %v315
        %v319 = vadd.f32 %v299, %v316
        %v320 = vmul.f32 %v317, 0.25
        %v321 = vmul.f32 %v318, 0.25
        %v322 = vmul.f32 %v319, 0.25
        %p323 = scmp.eq.s32.totalorder %s23, 0
        // Predicated region
        $region29: #{tpu_custom_call.1} parent=27 // pred_check
          %p324 = pneg %p323
        $region30: #{tpu_custom_call.1} parent=27 // pred_check_branch
          %326 = sbr.rel (%p324) target = $region32
        $region31: #{tpu_custom_call.1} parent=27 // pred_region
          %v327 = vlaneseq
          %v328 = vshrl.u32 %v327, 7
          %v329 = vadd.s32 %v328, 8
          %v330 = vadd.s32 %v328, 16
          %v331 = vlaneseq
          %v332 = vand.u32 %v331, 127
          %vm333 = vcmp.eq.s32.totalorder %v328, %v332
          %vm334 = vcmp.eq.s32.totalorder %v329, %v332
          %vm335 = vcmp.eq.s32.totalorder %v330, %v332
          %v336 = vsel %vm333, 1, 0
          %v337 = vsel %vm334, 1, 0
          %v338 = vsel %vm335, 1, 0
          %v339 = vcvt.s32.f32 %v336
          %v340 = vcvt.s32.f32 %v337
          %v341 = vcvt.s32.f32 %v338
          %v342 = vadd.f32 %v339, %v320
          %v343 = vadd.f32 %v340, %v321
          %v344 = vadd.f32 %v341, %v322
          %vm345 = vcmask 138240
          %346 = vst.msk [vmem:[%s240] sm:$0xff] %vm345, %v342
          %347 = vst.msk [vmem:[%s240 + $0x8] sm:$0xff] %vm345, %v343
          %vm348 = vcmask 131072
          %349 = vst.msk [vmem:[%s240 + $0x10] sm:$0x1] %vm348, %v344
        $region32: #{tpu_custom_call.1} parent=27 // pred_fallthru
          _
        %p350 = scmp.gt.s32.totalorder %s23, 0
        // Predicated region
        $region33: #{tpu_custom_call.1} parent=27 // pred_check
          %p351 = pneg %p350
        $region34: #{tpu_custom_call.1} parent=27 // pred_check_branch
          %353 = sbr.rel (%p351) target = $region36
        $region35: #{tpu_custom_call.1} parent=27 // pred_region
          %v354 = vld [vmem:[%s240] sm:$0xff]
          %v355 = vld [vmem:[%s240 + $0x8] sm:$0xff]
          %v356 = vld [vmem:[%s240 + $0x10] sm:$0x1]
          %vm357 = vcmask 138240
          %v359 = vsel %vm357, %v320, 0
          %v362 = vsel %vm357, %v321, 0
          %v365 = vsel %vm357, %v322, 0
          %vm367 = vcmask 1040384
          %v369 = vsel %vm367, %v356, 0
          %371 = vmatprep.subr.mxu0 0.0
          %372 = vmatpush1.msra.mxu0 %v354
          %373 = vmatprep.subr.mxu0 0.0
          %374 = vmatpush1.msra.mxu0 %v355
          %375 = vmatprep.subr.mxu0 0.0
          %376 = vmatpush1.msra.mxu0 %v369
          %377 = vmatprep.subr.mxu0 0.0
          %378 = vmatpush1.msra.mxu0 0.0
          %379 = vmatprep.subr.mxu0 0.0
          %380 = vmatpush1.msra.mxu0 0.0
          %381 = vmatprep.subr.mxu0 0.0
          %382 = vmatpush1.msra.mxu0 0.0
          %383 = vmatprep.subr.mxu0 0.0
          %384 = vmatpush1.msra.mxu0 0.0
          %385 = vmatprep.subr.mxu0 0.0
          %386 = vmatpush1.msra.mxu0 0.0
          %387 = vmatprep.subr.mxu0 0.0
          %388 = vmatpush1.msra.mxu0 0.0
          %389 = vmatprep.subr.mxu0 0.0
          %390 = vmatpush1.msra.mxu0 0.0
          %391 = vmatprep.subr.mxu0 0.0
          %392 = vmatpush1.msra.mxu0 0.0
          %393 = vmatprep.subr.mxu0 0.0
          %394 = vmatpush1.msra.mxu0 0.0
          %395 = vmatprep.subr.mxu0 0.0
          %396 = vmatpush1.msra.mxu0 0.0
          %397 = vmatprep.subr.mxu0 0.0
          %398 = vmatpush1.msra.mxu0 0.0
          %399 = vmatprep.subr.mxu0 0.0
          %400 = vmatpush1.msra.mxu0 0.0
          %401 = vmatprep.subr.mxu0 0.0
          %402 = vmatpush1.msra.mxu0 0.0
          %403 = vmatprep.subr.mxu0 0.0
          %404 = vmatpush1.msra.mxu0 0.0
          %405 = vmatprep.subr.mxu0 0.0
          %406 = vmatpush1.msra.mxu0 0.0
          %407 = vmatprep.subr.mxu0 0.0
          %408 = vmatpush1.msra.mxu0 0.0
          %409 = vmatprep.subr.mxu0 0.0
          %410 = vmatpush1.msra.mxu0 0.0
          %411 = vmatprep.subr.mxu0 0.0
          %412 = vmatpush1.msra.mxu0 0.0
          %413 = vmatprep.subr.mxu0 0.0
          %414 = vmatpush1.msra.mxu0 0.0
          %415 = vmatprep.subr.mxu0 0.0
          %416 = vmatpush1.msra.mxu0 0.0
          %417 = vmatprep.subr.mxu0 0.0
          %418 = vmatpush1.msra.mxu0 0.0
          %419 = vmatprep.subr.mxu0 0.0
          %420 = vmatpush1.msra.mxu0 0.0
          %421 = vmatprep.subr.mxu0 0.0
          %422 = vmatpush1.msra.mxu0 0.0
          %423 = vmatprep.subr.mxu0 0.0
          %424 = vmatpush1.msra.mxu0 0.0
          %425 = vmatprep.subr.mxu0 0.0
          %426 = vmatpush1.msra.mxu0 0.0
          %427 = vmatprep.subr.mxu0 0.0
          %428 = vmatpush1.msra.mxu0 0.0
          %429 = vmatprep.subr.mxu0 0.0
          %430 = vmatpush1.msra.mxu0 0.0
          %431 = vmatprep.subr.mxu0 0.0
          %432 = vmatpush1.msra.mxu0 0.0
          %433 = vmatprep.subr.mxu0 0.0
          %434 = vmatpush1.msra.mxu0 0.0
          %435 = vmatprep.mubr.f32.mxu0 0.0
          %436 = vmatmul.mubr.f32.gmra.mrb[0].mxu0 %v359
          %v437 = vpop.f32.mrb[0].mxu0
          %v438 = vadd.f32 0.0, %v437
          %v439 = vpop.f32.mrb[0].mxu0
          %440 = vmatprep.mubr.f32.mxu0 0.0
          %441 = vmatmul.mubr.f32.gmra.mrb[0].mxu0 %v362
          %v442 = vpop.f32.mrb[0].mxu0
          %v443 = vadd.f32 0.0, %v442
          %v444 = vpop.f32.mrb[0].mxu0
          %445 = vmatprep.mubr.f32.mxu0 0.0
          %446 = vmatmul.mubr.f32.gmra.mrb[0].mxu0 %v365
          %v447 = vpop.f32.mrb[0].mxu0
          %v448 = vadd.f32 0.0, %v447
          %v449 = vpop.f32.mrb[0].mxu0
          %450 = vdwg.mxu0
          %v451 = vadd.f32 %v354, %v438
          %v452 = vadd.f32 %v355, %v443
          %v453 = vadd.f32 %v356, %v448
          %454 = vst.msk [vmem:[%s240] sm:$0xff] %vm357, %v451
          %455 = vst.msk [vmem:[%s240 + $0x8] sm:$0xff] %vm357, %v452
          %vm456 = vcmask 131072
          %457 = vst.msk [vmem:[%s240 + $0x10] sm:$0x1] %vm456, %v453
        $region36: #{tpu_custom_call.1} parent=27 // pred_fallthru
          _
        %p458 = scmp.eq.s32.totalorder %s23, 3
        // Predicated region
        $region37: #{tpu_custom_call.1} parent=27 // pred_check
          %p459 = pneg %p458
        $region38: #{tpu_custom_call.1} parent=27 // pred_check_branch
          %461 = sbr.rel (%p459) target = $region40
        $region39: #{tpu_custom_call.1} parent=27 // pred_region
          %v462 = vld [vmem:[%s240] sm:$0x1]
          %v463 = vlaneseq
          %v464 = vand.u32 %v463, 127
          %vm465 = vcmp.ge.s32.totalorder %v464, 1
          %v466 = vsel %vm465, %v462, inf
          %vm467 = vcmask 131072
          %v468 = vsel %vm467, %v466, inf
          %469 = vmin.xlane.f32.xlu0 %v468
          %v470 = vpop.xlane.xlu0 %469
          %v471 = vrot.slane %v470, 4
          %v472 = vmin.f32 %v470, %v471
          %v473 = vrot.slane %v472, 2
          %v474 = vmin.f32 %v472, %v473
          %v475 = vrot.slane %v474, 1
          %v476 = vmin.f32 %v474, %v475
          %s477 = vtos %v476
          %v478 = vsel %vm465, %v462, -inf
          %v479 = vsel %vm467, %v478, -inf
          %480 = vmax.xlane.f32.xlu0 %v479
          %v481 = vpop.xlane.xlu0 %480
          %v482 = vrot.slane %v481, 4
          %v483 = vmax.f32 %v481, %v482
          %v484 = vrot.slane %v483, 2
          %v485 = vmax.f32 %v483, %v484
          %v486 = vrot.slane %v485, 1
          %v487 = vmax.f32 %v485, %v486
          %s488 = vtos %v487
          %v489 = vstv %s477
          %v490 = vsub.f32 %v462, %v489
          %s491 = ssub.f32 %s488, %s477
          %s492 = sadd.f32 %s491, 1e-12
          %v493 = vstv %s492
          %v494 = vrcp.pop %v493
          %v495 = vmul.f32 %v490, %v494
          %496 = vst.msk [vmem:[%s217] sm:$0x1] %vm467, %v495
        $region40: #{tpu_custom_call.1} parent=27 // pred_fallthru
          _
        %p497 = scmp.lt.s32.totalorder %s22, 1
        %s498 = scalar_select %p497, %s22, 1
        %s499 = smul.addr %s498, 3
        %s500 = smul.addr %s499, 8
        %s501 = scalar_lea.vmem %s2, %s500
        %s502 = sand.u32 %s120, 1
        %s503 = scalar_lea.sflag [#allocation3], %s502
        %s504 = sand.u32 %s120, 1
        %s505 = scalar_lea.vmem [#allocation2], %s504
        // Predicated region
        $region41: #{tpu_custom_call.1} parent=27 // pred_check
          %p506 = pneg %p104
        $region42: #{tpu_custom_call.1} parent=27 // pred_check_branch
          %508 = sbr.rel (%p506) target = $region44
        $region43: #{tpu_custom_call.1} parent=27 // pred_region
          _
        $region44: #{tpu_custom_call.1} parent=27 // pred_fallthru
          _
        // Predicated region
        $region45: #{tpu_custom_call.1} parent=27 // pred_check
          %p509 = pneg %p130
        $region46: #{tpu_custom_call.1} parent=27 // pred_check_branch
          %511 = sbr.rel (%p509) target = $region48
        $region47: #{tpu_custom_call.1} parent=27 // pred_region
          %s513 = ssub.s32 16, 16
          %514 = vsyncadd %s503, %s513
          %s515 = smul.addr %s22, 16
          %s516 = scalar_lea.hbm %s3, %s515
          %s518 = sshll.u32 %s505, 4
          %s519 = int_to_ptr.vmem [resolvable:$true] %s518
          %521 = dma.vmem_to_hbm [thread:$0]  %s519, 16, %s516, %s503
        $region48: #{tpu_custom_call.1} parent=27 // pred_fallthru
          _
      $region28: #{tpu_custom_call.1} parent=5 // pred_fallthru
        _
      %p522 = scmp.le.s32.totalorder 2, %s13
      // Predicated region
      $region49: #{tpu_custom_call.1} parent=5 // pred_check
        %p523 = pneg %p522
      $region50: #{tpu_custom_call.1} parent=5 // pred_check_branch
        %525 = sbr.rel (%p523) target = $region52
      $region51: #{tpu_custom_call.1} parent=5 // pred_region
        %s526 = ssub.s32 %s13, 2
        // Predicated region
        $region53: #{tpu_custom_call.1} parent=51 // pred_check
          %p527 = pneg %p110
        $region54: #{tpu_custom_call.1} parent=51 // pred_check_branch
          %529 = sbr.rel (%p527) target = $region56
        $region55: #{tpu_custom_call.1} parent=51 // pred_region
          %p530 = scmp.lt.s32.totalorder %s24, 1
          %s531 = scalar_select %p530, %s24, 1
          %s532 = smul.addr %s531, 3
          %s533 = smul.addr %s532, 8
          %s534 = scalar_lea.vmem %s2, %s533
        $region56: #{tpu_custom_call.1} parent=51 // pred_fallthru
          _
        // Predicated region
        $region57: #{tpu_custom_call.1} parent=51 // pred_check
          %p535 = pneg %p136
        $region58: #{tpu_custom_call.1} parent=51 // pred_check_branch
          %537 = sbr.rel (%p535) target = $region60
        $region59: #{tpu_custom_call.1} parent=51 // pred_region
          %s538 = sand.u32 %s121, 1
          %s539 = scalar_lea.sflag [#allocation3], %s538
          %s540 = sand.u32 %s121, 1
          %s541 = scalar_lea.vmem [#allocation2], %s540
          %542 = dma.done %s539, 16
        $region60: #{tpu_custom_call.1} parent=51 // pred_fallthru
          _
      $region52: #{tpu_custom_call.1} parent=5 // pred_fallthru
        _
    $region6: #{tpu_custom_call.1} parent=1 // loop_footer
      %s17 = sadd.s32 1, %s13
    $region7: #{tpu_custom_call.1} parent=1 // loop_footer_branch
      %12 = sbr.rel target = $region3
    $region8: #{tpu_custom_call.1} parent=1 // loop_exit
      _
    %543 = vsyncpa [#allocation3], 1
    %s544 = scalar_lea.sflag [#allocation3], 1
    %545 = vsyncpa %s544, 1

</llo_original>
